<compile_context>
chip_gen: v6e
topology: v6e:2x2x1
jax: 0.10.0
libtpu: 0.0.40
codegen_flags: <defaults>
</compile_context>

<pallas_src>
import jax
import jax.numpy as jnp
from jax.experimental import pallas as pl
from jax.experimental.pallas import tpu as pltpu


def _cross_neuron_kernel(m_ref, x_ref, o_ref):
    # m_ref: (1, 1, C) f32 per-channel spatial means for this batch element.
    # x_ref / o_ref: (1, C, TILE_HW) tile of the flattened input / output.
    mm = m_ref[0].astype(jnp.float32)                       # (1, C)

    # score[i, j] = -(m[j] - m[i])^2   (symmetric, <= 0, exact 0 on the diagonal)
    diff = mm - mm.T                                        # (C, C)
    score = -(diff * diff)

    # softmax: because score is symmetric, softmax along the lane axis (-1) equals
    # (softmax over dim=1 in the torch code)^T, i.e. exactly the LHS we need below.
    # score <= 0 with a 0 per row, so the usual max-subtraction is redundant.
    e = jnp.exp(score)
    denom = jnp.sum(e, axis=-1, keepdims=True)              # (C, 1) lane reduce
    attn_t = e * pl.reciprocal(denom, approx=True)          # (C, C) == attn^T

    # out[j, s] = sum_i attn[i, j] * x[i, s]  ==  attn_t @ x   (canonical MXU matmul)
    x = x_ref[0]                                            # (C, TILE_HW), native dtype
    out = jnp.dot(attn_t.astype(x.dtype), x,
                  preferred_element_type=jnp.float32)       # (C, TILE_HW) f32

    y = jnp.maximum(x.astype(jnp.float32) + 0.1 * out, 0.0)
    o_ref[0] = y.astype(o_ref.dtype)


def _round_up(n, m):
    return ((n + m - 1) // m) * m


def cross_neuron_block(x, *, max_tile_hw=512):
    """x: (bt, c, h, w) -> (bt, c, h, w), same dtype."""
    assert max_tile_hw % 128 == 0
    bt, c, h, w = x.shape
    hw = h * w
    x_flat = x.reshape(bt, c, hw)

    # Per-(batch, channel) spatial mean, f32-accumulated. (.detach() in torch only
    # affects gradients; forward value is identical.)
    m = jnp.mean(x_flat.astype(jnp.float32), axis=-1).reshape(bt, 1, c)

    # Lane-dense spatial tiling: TILE_HW is a multiple of 128; pad HW up to a
    # multiple of the tile (padded columns are zeros and are sliced off below —
    # they do not affect the mean, which was computed on the true extent).
    hw_128 = _round_up(hw, 128)
    tile = hw_128 if hw_128 <= max_tile_hw else max_tile_hw
    hw_pad = _round_up(hw, tile)
    if hw_pad != hw:
        x_flat = jnp.pad(x_flat, ((0, 0), (0, 0), (0, hw_pad - hw)))
    n_hw = hw_pad // tile

    # Per-step VMEM (double-buffered in + out tile) stays well under the default
    # scoped limit on v5e/v6e/v7x for any c at TILE_HW <= 512, so no explicit
    # vmem_limit_bytes is needed.
    out_flat = pl.pallas_call(
        _cross_neuron_kernel,
        out_shape=jax.ShapeDtypeStruct((bt, c, hw_pad), x.dtype),
        grid_spec=pltpu.PrefetchScalarGridSpec(
            num_scalar_prefetch=0,
            grid=(bt, n_hw),
            in_specs=[
                pl.BlockSpec((1, 1, c), lambda b, t: (b, 0, 0)),     # means (tiny)
                pl.BlockSpec((1, c, tile), lambda b, t: (b, 0, t)),  # x tile (streamed)
            ],
            out_specs=pl.BlockSpec((1, c, tile), lambda b, t: (b, 0, t)),
        ),
        compiler_params=pltpu.CompilerParams(
            # Both axes independent -> megacore sharding on v7x can use both TCs.
            dimension_semantics=("parallel", "parallel"),
        ),
    )(m, x_flat)

    if hw_pad != hw:
        out_flat = out_flat[:, :, :hw]
    return out_flat.reshape(bt, c, h, w)


def _reference(x):
    """Pure-JAX reference mirroring the PyTorch forward (for verification)."""
    bt, c, h, w = x.shape
    x_stretch = x.reshape(bt, c, h * w)
    x_v = jnp.transpose(x_stretch, (0, 2, 1))             # (bt, hw, c)
    x_m = jnp.mean(x_v, axis=1).reshape(bt, 1, c)         # (bt, 1, c)
    score = -(x_m - jnp.transpose(x_m, (0, 2, 1))) ** 2   # (bt, c, c)
    attn = jax.nn.softmax(score, axis=1)
    out = jnp.einsum("bsc,bcd->bsd", x_v, attn)           # (bt, hw, c)
    out = jnp.transpose(out, (0, 2, 1)).reshape(bt, c, h, w)
    return jax.nn.relu(x + 0.1 * out)


if __name__ == "__main__":
    key = jax.random.PRNGKey(0)
    bt, c, h, w = 2, 4, 16, 16
    x = jax.random.normal(key, (bt, c, h, w), dtype=jnp.float32)

    y = cross_neuron_block(x)
    y = jax.block_until_ready(y)

    y_ref = _reference(x)
    assert y.shape == (bt, c, h, w)
    # Tolerance accounts for the EUP approx reciprocal in the softmax normalization.
    assert jnp.allclose(y, y_ref, rtol=2e-3, atol=2e-3), "mismatch vs reference"

    print("KERNEL_OK")
</pallas_src>

<mosaic_0001>
module attributes {stable_mosaic.version = 11 : i64} {
  func.func @_cross_neuron_kernel(%arg0: i32, %arg1: i32, %arg2: memref<1x1x4xf32, #tpu.memory_space<vmem>>, %arg3: memref<1x4x256xf32, #tpu.memory_space<vmem>>, %arg4: memref<1x4x256xf32, #tpu.memory_space<vmem>>) attributes {dimension_semantics = [#tpu.dimension_semantics<parallel>, #tpu.dimension_semantics<parallel>], iteration_bounds = array<i64: 2, 1>, scalar_prefetch = 0 : i64, scratch_operands = 0 : i64, tpu.core_type = #tpu.core_type<tc>, window_params = [{transform_indices = @transform_0, window_bounds = array<i64: 1, 1, 4>}, {transform_indices = @transform_1, window_bounds = array<i64: 1, 4, 256>}, {transform_indices = @transform_2, window_bounds = array<i64: 1, 4, 256>}]} {
    %c0 = arith.constant 0 : index
    %c0_0 = arith.constant 0 : index
    %c0_1 = arith.constant 0 : index
    %0 = vector.load %arg2[%c0, %c0_0, %c0_1] : memref<1x1x4xf32, #tpu.memory_space<vmem>>, vector<1x1x4xf32>
    %1 = vector.shape_cast %0 : vector<1x1x4xf32> to vector<1x4xf32>
    %2 = tpu.transpose %1, [1, 0] : vector<1x4xf32> -> vector<4x1xf32>
    %3 = vector.broadcast %1 : vector<1x4xf32> to vector<4x4xf32>
    %4 = vector.broadcast %2 : vector<4x1xf32> to vector<4x4xf32>
    %5 = arith.subf %3, %4 : vector<4x4xf32>
    %6 = arith.mulf %5, %5 : vector<4x4xf32>
    %cst = arith.constant 0.000000e+00 : f32
    %7 = vector.broadcast %cst : f32 to vector<4x4xf32>
    %8 = arith.subf %7, %6 : vector<4x4xf32>
    %9 = math.exp %8 : vector<4x4xf32>
    %cst_2 = arith.constant dense<0.000000e+00> : vector<4xf32>
    %10 = vector.multi_reduction <add>, %9, %cst_2 [1] : vector<4x4xf32> to vector<4xf32>
    %11 = vector.shape_cast %10 : vector<4xf32> to vector<4x1xf32>
    %12 = tpu.reciprocal %11 {approx = true} : vector<4x1xf32> -> vector<4x1xf32>
    %13 = vector.broadcast %12 : vector<4x1xf32> to vector<4x4xf32>
    %14 = arith.mulf %9, %13 : vector<4x4xf32>
    %c0_3 = arith.constant 0 : index
    %c0_4 = arith.constant 0 : index
    %c0_5 = arith.constant 0 : index
    %15 = vector.load %arg3[%c0_3, %c0_4, %c0_5] : memref<1x4x256xf32, #tpu.memory_space<vmem>>, vector<1x4x256xf32>
    %16 = vector.shape_cast %15 : vector<1x4x256xf32> to vector<4x256xf32>
    %cst_6 = arith.constant dense<0.000000e+00> : vector<4x256xf32>
    %17 = tpu.matmul %14, %16, %cst_6 {dimension_numbers = #tpu.dot_dimension_numbers<[1], [0], [0], [1], [0, 0, 1, 1], [], []>} : vector<4x4xf32>, vector<4x256xf32>, vector<4x256xf32> -> vector<4x256xf32>
    %cst_7 = arith.constant 1.000000e-01 : f32
    %18 = vector.broadcast %cst_7 : f32 to vector<4x256xf32>
    %19 = arith.mulf %18, %17 : vector<4x256xf32>
    %20 = arith.addf %16, %19 : vector<4x256xf32>
    %cst_8 = arith.constant 0.000000e+00 : f32
    %21 = vector.broadcast %cst_8 : f32 to vector<4x256xf32>
    %22 = arith.maximumf %20, %21 : vector<4x256xf32>
    %c0_9 = arith.constant 0 : index
    %c0_10 = arith.constant 0 : index
    %c0_11 = arith.constant 0 : index
    %23 = vector.load %arg4[%c0_9, %c0_10, %c0_11] : memref<1x4x256xf32, #tpu.memory_space<vmem>>, vector<1x4x256xf32>
    %24 = vector.shape_cast %23 : vector<1x4x256xf32> to vector<4x256xf32>
    %25 = vector.shape_cast %22 : vector<4x256xf32> to vector<1x4x256xf32>
    tpu.vector_store %arg4[%c0_9, %c0_10, %c0_11], %25 {strides = array<i32>} : memref<1x4x256xf32, #tpu.memory_space<vmem>>, vector<1x4x256xf32>,
    return
  }
  func.func @transform_0(%arg0: i32, %arg1: i32) -> (i32, i32, i32) {
    %c0_i32 = arith.constant 0 : i32
    %c0_i32_0 = arith.constant 0 : i32
    %c0_i32_1 = arith.constant 0 : i32
    return %arg0, %c0_i32, %c0_i32_0 : i32, i32, i32
  }
  func.func @transform_1(%arg0: i32, %arg1: i32) -> (i32, i32, i32) {
    %c0_i32 = arith.constant 0 : i32
    %c0_i32_0 = arith.constant 0 : i32
    return %arg0, %c0_i32, %arg1 : i32, i32, i32
  }
  func.func @transform_2(%arg0: i32, %arg1: i32) -> (i32, i32, i32) {
    %c0_i32 = arith.constant 0 : i32
    %c0_i32_0 = arith.constant 0 : i32
    return %arg0, %c0_i32, %arg1 : i32, i32, i32
  }
}

</mosaic_0001>

<llo_original>
// kernel: tpu_custom_call.1
$region0: #{tpu_custom_call.1}
  #allocation0 [shape = 'u32[]', space=smem, size = 0x4, offset = 0x4, fixed_abs, tag = 'smem constant byte address 0x4 - core index']
  #allocation1 [shape = 'u32[144,128]{1,0:T(1,128)}', space=vmem, size = 0x12000, scoped, tag = 'internal scratch']
  %s0 = inlined_call_operand.hbm [shape: f32[2,1,4], index: 0, kind: input, shape index: {}]
  %s1 = inlined_call_operand.hbm [shape: f32[2,4,256], index: 1, kind: input, shape index: {}]
  %s2 = inlined_call_operand.hbm [shape: f32[2,4,256], index: 2, kind: output, shape index: {}]
  %s3 = sld [smem:[#allocation0]]
  $region49: #{tpu_custom_call.1} parent=0
    _
  %s5 = ssub.s32 1, %s3
  %s6 = scalar_select 0, %s5, %s3
  $region1: #{tpu_custom_call.1} parent=0
    #allocation2 [shape = 'u8[1024]{0}', space=vmem, size = 0x400, scoped, tag = 'input window, operand 0']
    #allocation3 [shape = 's32[2]{0}', space=sflag, size = 0x8, scoped, tag = 'scoped memory for tpu_custom_call.1']
    #allocation4 [shape = 's32[2]{0}', space=sflag, size = 0x8, scoped, tag = 'scoped memory for tpu_custom_call.1']
    #allocation5 [shape = 'u8[8192]{0}', space=vmem, size = 0x2000, scoped, tag = 'input window, operand 1']
    #allocation6 [shape = 's32[2]{0}', space=sflag, size = 0x8, scoped, tag = 'scoped memory for tpu_custom_call.1']
    #allocation7 [shape = 'u8[8192]{0}', space=vmem, size = 0x2000, scoped, tag = 'output window, operand 0']
    %7 = vsyncpa [#allocation3], 0
    %s8 = scalar_lea.sflag [#allocation3], 1
    %9 = vsyncpa %s8, 0
    %10 = vsyncpa [#allocation6], 0
    %s11 = scalar_lea.sflag [#allocation6], 1
    %12 = vsyncpa %s11, 0
    %13 = vsyncpa [#allocation4], 0
    %s14 = scalar_lea.sflag [#allocation4], 1
    %15 = vsyncpa %s14, 0
    loop: start=0, step=1, limit=4
    $region2: #{tpu_custom_call.1} parent=1 // loop_pre_header
      _
    $region3: #{tpu_custom_call.1} parent=1 // loop_header
      %s17 = sphi 0, %s21
      %p18 = scmp.ge.s32.totalorder %s17, 4
      %s24 = sphi 0, %s36
      %s25 = sphi 0, %s32
      %s26 = sphi 0, %s24
      %s27 = sphi 0, %s25
      %s28 = sphi 0, %s26
      %s29 = sphi 0, %s27
      %s39 = sphi 0, %s41
      %s42 = sphi 0, %s39
      %s43 = sphi 0, %s42
      %s59 = sphi 0, %s43
      %s67 = sphi 0, %s69
      %s70 = sphi 0, %s67
      %s71 = sphi 0, %s70
      %s87 = sphi 0, %s71
      %s95 = sphi 0, %s97
      %s98 = sphi 0, %s95
      %s99 = sphi 0, %s98
      %s115 = sphi 0, %s99
    $region4: #{tpu_custom_call.1} parent=1 // loop_header_branch
      %20 = sbr.rel (%p18) target = $region8
    $region5: #{tpu_custom_call.1} parent=1 // loop_body
      %s22 = ssub.s32 %s17, 1
      %s23 = ssub.s32 %s17, 2
      %s30 = sadd.s32 1, %s25
      %p31 = scmp.ge.s32.totalorder %s30, 1
      %s32 = scalar_select %p31, 0, %s30
      %s33 = sadd.s32 1, %s24
      %s34 = scalar_select %p31, %s33, %s24
      %p35 = scmp.ge.s32.totalorder %s34, 2
      %s36 = scalar_select %p35, 0, %s34
      %s37 = ssub.s32 %s24, %s36
      %p38 = scmp.eq.s32.totalorder %s37, 0
      %s40 = sadd.s32 %s39, 1
      %s41 = scalar_select %p38, %s39, %s40
      %p44 = pneg %p38
      %p45 = scmp.eq.s32.totalorder %s17, 1
      %p46 = por %p44, %p45
      %p47 = scmp.ne.s32.totalorder %s39, %s42
      %p48 = scmp.eq.s32.totalorder %s17, 0
      %p49 = por %p47, %p48
      %p50 = scmp.ne.s32.totalorder %s39, %s42
      %p51 = scmp.eq.s32.totalorder %s22, 1
      %p52 = por %p50, %p51
      %p53 = scmp.ne.s32.totalorder %s42, %s43
      %p54 = scmp.eq.s32.totalorder %s22, 0
      %p55 = por %p53, %p54
      %p56 = scmp.ne.s32.totalorder %s42, %s43
      %p57 = scmp.eq.s32.totalorder %s23, 1
      %p58 = por %p56, %p57
      %p60 = scmp.ne.s32.totalorder %s43, %s59
      %p61 = scmp.eq.s32.totalorder %s23, 0
      %p62 = por %p60, %p61
      %s63 = ssub.s32 %s24, %s36
      %s64 = ssub.s32 %s25, %s32
      %s65 = sor.u32 %s63, %s64
      %p66 = scmp.eq.s32.totalorder %s65, 0
      %s68 = sadd.s32 %s67, 1
      %s69 = scalar_select %p66, %s67, %s68
      %p72 = pneg %p66
      %p73 = scmp.eq.s32.totalorder %s17, 1
      %p74 = por %p72, %p73
      %p75 = scmp.ne.s32.totalorder %s67, %s70
      %p76 = scmp.eq.s32.totalorder %s17, 0
      %p77 = por %p75, %p76
      %p78 = scmp.ne.s32.totalorder %s67, %s70
      %p79 = scmp.eq.s32.totalorder %s22, 1
      %p80 = por %p78, %p79
      %p81 = scmp.ne.s32.totalorder %s70, %s71
      %p82 = scmp.eq.s32.totalorder %s22, 0
      %p83 = por %p81, %p82
      %p84 = scmp.ne.s32.totalorder %s70, %s71
      %p85 = scmp.eq.s32.totalorder %s23, 1
      %p86 = por %p84, %p85
      %p88 = scmp.ne.s32.totalorder %s71, %s87
      %p89 = scmp.eq.s32.totalorder %s23, 0
      %p90 = por %p88, %p89
      %s91 = ssub.s32 %s24, %s36
      %s92 = ssub.s32 %s25, %s32
      %s93 = sor.u32 %s91, %s92
      %p94 = scmp.eq.s32.totalorder %s93, 0
      %s96 = sadd.s32 %s95, 1
      %s97 = scalar_select %p94, %s95, %s96
      %p100 = pneg %p94
      %p101 = scmp.eq.s32.totalorder %s17, 1
      %p102 = por %p100, %p101
      %p103 = scmp.ne.s32.totalorder %s95, %s98
      %p104 = scmp.eq.s32.totalorder %s17, 0
      %p105 = por %p103, %p104
      %p106 = scmp.ne.s32.totalorder %s95, %s98
      %p107 = scmp.eq.s32.totalorder %s22, 1
      %p108 = por %p106, %p107
      %p109 = scmp.ne.s32.totalorder %s98, %s99
      %p110 = scmp.eq.s32.totalorder %s22, 0
      %p111 = por %p109, %p110
      %p112 = scmp.ne.s32.totalorder %s98, %s99
      %p113 = scmp.eq.s32.totalorder %s23, 1
      %p114 = por %p112, %p113
      %p116 = scmp.ne.s32.totalorder %s99, %s115
      %p117 = scmp.eq.s32.totalorder %s23, 0
      %p118 = por %p116, %p117
      %p119 = scmp.le.s32.totalorder 1, %s17
      %p120 = scmp.lt.s32.totalorder %s17, 3
      %p121 = pnand %p119, %p120
      %p122 = pneg %p121
      // Predicated region
      $region9: #{tpu_custom_call.1} parent=5 // pred_check
        _
      $region10: #{tpu_custom_call.1} parent=5 // pred_check_branch
        %124 = sbr.rel (%p121) target = $region12
      $region11: #{tpu_custom_call.1} parent=5 // pred_region
        %s125 = ssub.s32 %s17, 1
      $region12: #{tpu_custom_call.1} parent=5 // pred_fallthru
        _
      %p126 = scmp.lt.s32.totalorder %s17, 2
      // Predicated region
      $region13: #{tpu_custom_call.1} parent=5 // pred_check
        %p127 = pneg %p126
      $region14: #{tpu_custom_call.1} parent=5 // pred_check_branch
        %129 = sbr.rel (%p127) target = $region16
      $region15: #{tpu_custom_call.1} parent=5 // pred_region
        // Predicated region
        $region17: #{tpu_custom_call.1} parent=15 // pred_check
          %p130 = pneg %p49
        $region18: #{tpu_custom_call.1} parent=15 // pred_check_branch
          %132 = sbr.rel (%p130) target = $region20
        $region19: #{tpu_custom_call.1} parent=15 // pred_region
          %s133 = sand.u32 %s39, 1
          %s134 = scalar_lea.sflag [#allocation3], %s133
          %s135 = sand.u32 %s39, 1
          %s136 = scalar_lea.vmem [#allocation2], %s135
          %s138 = ssub.s32 16, 16
          %139 = vsyncadd %s134, %s138
          %s140 = smul.addr %s24, 16
          %s141 = scalar_lea.hbm %s0, %s140
          %s143 = sshll.u32 %s136, 4
          %s144 = int_to_ptr.vmem [resolvable:$true] %s143
          %146 = dma.hbm_to_vmem [thread:$0]  %s141, 16, %s144, %s134
        $region20: #{tpu_custom_call.1} parent=15 // pred_fallthru
          _
        // Predicated region
        $region21: #{tpu_custom_call.1} parent=15 // pred_check
          %p147 = pneg %p77
        $region22: #{tpu_custom_call.1} parent=15 // pred_check_branch
          %149 = sbr.rel (%p147) target = $region24
        $region23: #{tpu_custom_call.1} parent=15 // pred_region
          %s150 = sand.u32 %s67, 1
          %s151 = scalar_lea.sflag [#allocation6], %s150
          %s152 = sand.u32 %s67, 1
          %s153 = smul.addr %s152, 8
          %s154 = scalar_lea.vmem [#allocation5], %s153
          %s155 = smul.u32 2, %s25
          %s157 = ssub.s32 128, 128
          %158 = vsyncadd %s151, %s157
          %s159 = smul.addr %s24, 2
          %s160 = sadd.s32 %s155, %s159
          %s161 = smul.addr %s160, 64
          %s162 = scalar_lea.hbm %s1, %s161
          %s164 = sshll.u32 %s154, 4
          %s165 = int_to_ptr.vmem [resolvable:$true] %s164
          %167 = dma.hbm_to_vmem [thread:$0]  %s162, 128, %s165, %s151
        $region24: #{tpu_custom_call.1} parent=15 // pred_fallthru
          _
      $region16: #{tpu_custom_call.1} parent=5 // pred_fallthru
        _
      %p168 = scmp.le.s32.totalorder 1, %s17
      %p169 = scmp.lt.s32.totalorder %s17, 3
      %p170 = pnand %p168, %p169
      %p171 = pneg %p170
      // Predicated region
      $region25: #{tpu_custom_call.1} parent=5 // pred_check
        _
      $region26: #{tpu_custom_call.1} parent=5 // pred_check_branch
        %173 = sbr.rel (%p170) target = $region28
      $region27: #{tpu_custom_call.1} parent=5 // pred_region
        %s174 = ssub.s32 %s17, 1
        %s175 = sand.u32 %s42, 1
        %s176 = scalar_lea.sflag [#allocation3], %s175
        %s177 = sand.u32 %s42, 1
        %s178 = scalar_lea.vmem [#allocation2], %s177
        // Predicated region
        $region29: #{tpu_custom_call.1} parent=27 // pred_check
          %p179 = pneg %p55
        $region30: #{tpu_custom_call.1} parent=27 // pred_check_branch
          %181 = sbr.rel (%p179) target = $region32
        $region31: #{tpu_custom_call.1} parent=27 // pred_region
          %182 = dma.done %s176, 16
        $region32: #{tpu_custom_call.1} parent=27 // pred_fallthru
          _
        %s183 = sand.u32 %s70, 1
        %s184 = scalar_lea.sflag [#allocation6], %s183
        %s185 = sand.u32 %s70, 1
        %s186 = smul.addr %s185, 8
        %s187 = scalar_lea.vmem [#allocation5], %s186
        // Predicated region
        $region33: #{tpu_custom_call.1} parent=27 // pred_check
          %p188 = pneg %p83
        $region34: #{tpu_custom_call.1} parent=27 // pred_check_branch
          %190 = sbr.rel (%p188) target = $region36
        $region35: #{tpu_custom_call.1} parent=27 // pred_region
          %191 = dma.done %s184, 128
        $region36: #{tpu_custom_call.1} parent=27 // pred_fallthru
          _
        %s192 = sand.u32 %s42, 1
        %s193 = scalar_lea.sflag [#allocation3], %s192
        %s194 = sand.u32 %s42, 1
        %s195 = scalar_lea.vmem [#allocation2], %s194
        %p196 = pneg %p55
        %p197 = pneg %p52
        %s198 = sand.u32 %s70, 1
        %s199 = scalar_lea.sflag [#allocation6], %s198
        %s200 = sand.u32 %s70, 1
        %s201 = smul.addr %s200, 8
        %s202 = scalar_lea.vmem [#allocation5], %s201
        %p203 = pneg %p83
        %p204 = pneg %p80
        %p205 = pneg %p111
        %p206 = pneg %p108
        %s207 = sand.u32 %s98, 1
        %s208 = scalar_lea.sflag [#allocation4], %s207
        %s209 = sand.u32 %s98, 1
        %s210 = smul.addr %s209, 8
        %s211 = scalar_lea.vmem [#allocation7], %s210
        %s212 = smul.u32 2, %s27
        %s213 = smul.u32 2, %s27
        %v214 = vld [vmem:[%s178] sm:$0x1]
        %215 = vxpose.xlu0.b32.start [1/16] %v214, 128
        %216 = vxpose.xlu0.b32.cont [2/16] 0.0, 128
        %217 = vxpose.xlu0.b32.cont [3/16] 0.0, 128
        %218 = vxpose.xlu0.b32.cont [4/16] 0.0, 128
        %219 = vxpose.xlu0.b32.cont [5/16] 0.0, 128
        %220 = vxpose.xlu0.b32.cont [6/16] 0.0, 128
        %221 = vxpose.xlu0.b32.cont [7/16] 0.0, 128
        %222 = vxpose.xlu0.b32.cont [8/16] 0.0, 128
        %223 = vxpose.xlu0.b32.cont [9/16] 0.0, 128
        %224 = vxpose.xlu0.b32.cont [10/16] 0.0, 128
        %225 = vxpose.xlu0.b32.cont [11/16] 0.0, 128
        %226 = vxpose.xlu0.b32.cont [12/16] 0.0, 128
        %227 = vxpose.xlu0.b32.cont [13/16] 0.0, 128
        %228 = vxpose.xlu0.b32.cont [14/16] 0.0, 128
        %229 = vxpose.xlu0.b32.cont [15/16] 0.0, 128
        %230 = vxpose.xlu0.b32.end [16/16] 0.0, 128
        %v231 = vpop.trf.xlu0
        %v232 = vpop.trf.xlu0
        %v233 = vpop.trf.xlu0
        %v234 = vpop.trf.xlu0
        %v235 = vpop.trf.xlu0
        %v236 = vpop.trf.xlu0
        %v237 = vpop.trf.xlu0
        %v238 = vpop.trf.xlu0
        %v239 = vpop.trf.xlu0
        %v240 = vpop.trf.xlu0
        %v241 = vpop.trf.xlu0
        %v242 = vpop.trf.xlu0
        %v243 = vpop.trf.xlu0
        %v244 = vpop.trf.xlu0
        %v245 = vpop.trf.xlu0
        %v246 = vpop.trf.xlu0
        %v248 = vlaneseq
        %v249 = vshrl.u32 %v248, 7
        %v250 = vsub.s32 0, %v249
        %v251 = vrot.slane %v214, %v250
        %254 = vset.pattern.permute.xlu0 0
        %255 = vperm.xlu0 %254, %v231
        %v256 = vpop.permute.xlu0 %255
        %v258 = vsub.f32 %v251, %v256
        %v259 = vmul.f32 %v258, %v258
        %v260 = vsub.f32 0.0, %v259
        %v261 = vmul.f32 %v260, 1.442695
        %v262 = vpow.pop %v261
        %vm263 = vcmask 27648
        %v264 = vsel %vm263, %v262, 0.0
        %265 = vadd.xlane.f32.xlu0 %v264
        %v266 = vpop.xlane.xlu0 %265
        %v267 = vrcp.pop %v266
        %v268 = vmul.f32 %v262, %v267
        %v269 = vld [vmem:[%s187] sm:$0xff]
        %v271 = vcombine.high %v269, %v269
        %vm272 = vcmask 31744
        %v274 = vsel %vm272, %v268, 0
        %vm276 = vcmask 1043456
        %v277 = vsel %vm276, %v269, 0
        %v279 = vsel %vm276, %v271, 0
        %281 = vmatprep.subr.mxu0 0.0
        %282 = vmatpush1.msra.mxu0 0.0
        %283 = vmatprep.subr.mxu0 0.0
        %284 = vmatpush1.msra.mxu0 0.0
        %285 = vmatprep.subr.mxu0 0.0
        %286 = vmatpush1.msra.mxu0 0.0
        %287 = vmatprep.subr.mxu0 0.0
        %288 = vmatpush1.msra.mxu0 0.0
        %289 = vmatprep.subr.mxu0 0.0
        %290 = vmatpush1.msra.mxu0 0.0
        %291 = vmatprep.subr.mxu0 0.0
        %292 = vmatpush1.msra.mxu0 0.0
        %293 = vmatprep.subr.mxu0 0.0
        %294 = vmatpush1.msra.mxu0 0.0
        %295 = vmatprep.subr.mxu0 0.0
        %296 = vmatpush1.msra.mxu0 0.0
        %297 = vmatprep.subr.mxu0 0.0
        %298 = vmatpush1.msra.mxu0 0.0
        %299 = vmatprep.subr.mxu0 0.0
        %300 = vmatpush1.msra.mxu0 0.0
        %301 = vmatprep.subr.mxu0 0.0
        %302 = vmatpush1.msra.mxu0 0.0
        %303 = vmatprep.subr.mxu0 0.0
        %304 = vmatpush1.msra.mxu0 0.0
        %305 = vmatprep.subr.mxu0 0.0
        %306 = vmatpush1.msra.mxu0 0.0
        %307 = vmatprep.subr.mxu0 0.0
        %308 = vmatpush1.msra.mxu0 0.0
        %309 = vmatprep.subr.mxu0 0.0
        %310 = vmatpush1.msra.mxu0 0.0
        %311 = vmatprep.subr.mxu0 %v279
        %312 = vmatpush1.msra.mxu0 %v277
        %313 = vmatprep.subr.mxu0 0.0
        %314 = vmatpush2.msra.mxu0 0.0
        %315 = vmatprep.subr.mxu0 0.0
        %316 = vmatpush2.msra.mxu0 0.0
        %317 = vmatprep.subr.mxu0 0.0
        %318 = vmatpush2.msra.mxu0 0.0
        %319 = vmatprep.subr.mxu0 0.0
        %320 = vmatpush2.msra.mxu0 0.0
        %321 = vmatprep.subr.mxu0 0.0
        %322 = vmatpush2.msra.mxu0 0.0
        %323 = vmatprep.subr.mxu0 0.0
        %324 = vmatpush2.msra.mxu0 0.0
        %325 = vmatprep.subr.mxu0 0.0
        %326 = vmatpush2.msra.mxu0 0.0
        %327 = vmatprep.subr.mxu0 0.0
        %328 = vmatpush2.msra.mxu0 0.0
        %329 = vmatprep.subr.mxu0 0.0
        %330 = vmatpush2.msra.mxu0 0.0
        %331 = vmatprep.subr.mxu0 0.0
        %332 = vmatpush2.msra.mxu0 0.0
        %333 = vmatprep.subr.mxu0 0.0
        %334 = vmatpush2.msra.mxu0 0.0
        %335 = vmatprep.subr.mxu0 0.0
        %336 = vmatpush2.msra.mxu0 0.0
        %337 = vmatprep.subr.mxu0 0.0
        %338 = vmatpush2.msra.mxu0 0.0
        %339 = vmatprep.subr.mxu0 0.0
        %340 = vmatpush2.msra.mxu0 0.0
        %341 = vmatprep.subr.mxu0 0.0
        %342 = vmatpush2.msra.mxu0 0.0
        %343 = vmatprep.subr.mxu0 0.0
        %344 = vmatpush2.msra.mxu0 0.0
        %345 = vmatprep.mubr.f32.mxu0 0.0
        %346 = vmatmul.mubr.f32.gmra.mxu0 %v274
        %v347 = vpop.f32.mrf.mxu0
        %v348 = vadd.f32 0.0, %v347
        %v349 = vpop.f32.mrf.mxu0
        %v350 = vadd.f32 0.0, %v349
        %351 = vdwg.mxu0
        %v352 = vmul.f32 %v348, 0.1
        %v353 = vmul.f32 %v350, 0.1
        %v356 = vcombine.low %v352, %v353
        %v358 = vadd.f32 %v269, %v356
        %v359 = vmax.f32 %v358, 0.0
        %360 = vst [vmem:[%s211] sm:$0xff] %v359
        %s361 = sand.u32 %s98, 1
        %s362 = scalar_lea.sflag [#allocation4], %s361
        %s363 = sand.u32 %s98, 1
        %s364 = smul.addr %s363, 8
        %s365 = scalar_lea.vmem [#allocation7], %s364
        // Predicated region
        $region37: #{tpu_custom_call.1} parent=27 // pred_check
          %p366 = pneg %p108
        $region38: #{tpu_custom_call.1} parent=27 // pred_check_branch
          %368 = sbr.rel (%p366) target = $region40
        $region39: #{tpu_custom_call.1} parent=27 // pred_region
          %s369 = smul.u32 2, %s27
          %s371 = ssub.s32 128, 128
          %372 = vsyncadd %s362, %s371
          %s373 = smul.addr %s26, 2
          %s374 = sadd.s32 %s369, %s373
          %s375 = smul.addr %s374, 64
          %s376 = scalar_lea.hbm %s2, %s375
          %s378 = sshll.u32 %s365, 4
          %s379 = int_to_ptr.vmem [resolvable:$true] %s378
          %381 = dma.vmem_to_hbm [thread:$0]  %s379, 128, %s376, %s362
        $region40: #{tpu_custom_call.1} parent=27 // pred_fallthru
          _
      $region28: #{tpu_custom_call.1} parent=5 // pred_fallthru
        _
      %p382 = scmp.le.s32.totalorder 2, %s17
      // Predicated region
      $region41: #{tpu_custom_call.1} parent=5 // pred_check
        %p383 = pneg %p382
      $region42: #{tpu_custom_call.1} parent=5 // pred_check_branch
        %385 = sbr.rel (%p383) target = $region44
      $region43: #{tpu_custom_call.1} parent=5 // pred_region
        %s386 = ssub.s32 %s17, 2
        // Predicated region
        $region45: #{tpu_custom_call.1} parent=43 // pred_check
          %p387 = pneg %p114
        $region46: #{tpu_custom_call.1} parent=43 // pred_check_branch
          %389 = sbr.rel (%p387) target = $region48
        $region47: #{tpu_custom_call.1} parent=43 // pred_region
          %s390 = sand.u32 %s99, 1
          %s391 = scalar_lea.sflag [#allocation4], %s390
          %s392 = sand.u32 %s99, 1
          %s393 = smul.addr %s392, 8
          %s394 = scalar_lea.vmem [#allocation7], %s393
          %395 = dma.done %s391, 128
        $region48: #{tpu_custom_call.1} parent=43 // pred_fallthru
          _
      $region44: #{tpu_custom_call.1} parent=5 // pred_fallthru
        _
    $region6: #{tpu_custom_call.1} parent=1 // loop_footer
      %s21 = sadd.s32 1, %s17
    $region7: #{tpu_custom_call.1} parent=1 // loop_footer_branch
      %16 = sbr.rel target = $region3
    $region8: #{tpu_custom_call.1} parent=1 // loop_exit
      _
    %396 = vsyncpa [#allocation3], 1
    %s397 = scalar_lea.sflag [#allocation3], 1
    %398 = vsyncpa %s397, 1
    %399 = vsyncpa [#allocation6], 1
    %s400 = scalar_lea.sflag [#allocation6], 1
    %401 = vsyncpa %s400, 1
    %402 = vsyncpa [#allocation4], 1
    %s403 = scalar_lea.sflag [#allocation4], 1
    %404 = vsyncpa %s403, 1

</llo_original>
